<compile_context>
chip_gen: v5e
topology: v5e:2x2
jax: 0.10.0
libtpu: 0.0.40
codegen_flags: <defaults>
</compile_context>

<pallas_src>
import functools

import jax
import jax.numpy as jnp
from jax.experimental import pallas as pl
from jax.experimental.pallas import tpu as pltpu

MAX_SIGMA = 2.0
MIN_SIGMA = -20.0


def _round_up(x: int, m: int) -> int:
    return ((x + m - 1) // m) * m


def gaussian_net_kernel(x_ref, w1_ref, b1_ref, wh_ref, bh_ref,
                        mu_ref, sigma_ref, *, out_dim):
    # Hidden layer: Linear + Tanh  (MXU matmul, f32 accumulation; tanh -> EUP).
    h = jnp.tanh(
        jnp.dot(x_ref[...], w1_ref[...], preferred_element_type=jnp.float32)
        + b1_ref[...]
    )
    # Fused heads: one full-lane matmul over the packed [Wmu | Wsig | 0] slab.
    z = (
        jnp.dot(h, wh_ref[...], preferred_element_type=jnp.float32)
        + bh_ref[...]
    )
    # Narrow stores: cols [0, O) -> mu (tanh), cols [O, 2*O) -> sigma
    # (exp(clip(.))). Padding cols >= 2*O are never written out.
    mu_ref[...] = jnp.tanh(z[:, :out_dim]).astype(mu_ref.dtype)
    sigma_ref[...] = jnp.exp(
        jnp.clip(z[:, out_dim:2 * out_dim], MIN_SIGMA, MAX_SIGMA)
    ).astype(sigma_ref.dtype)


def pack_params(params):
    """Pack the two head weight matrices into one lane-dense (H, P>=128) slab.

    Done once, outside the forward path (avoids per-call dynamic-update-slice
    prologue ops and an extra HBM round trip of the packed slab).
    """
    wmu, bmu = params["wmu"], params["bmu"]      # (H, O), (1, O)
    wsig, bsig = params["wsig"], params["bsig"]  # (H, O), (1, O)
    H, O = wmu.shape
    P = max(128, _round_up(2 * O, 128))

    wh = jnp.zeros((H, P), jnp.float32)
    wh = wh.at[:, :O].set(wmu).at[:, O:2 * O].set(wsig)
    bh = jnp.zeros((1, P), jnp.float32)
    bh = bh.at[:, :O].set(bmu).at[:, O:2 * O].set(bsig)

    out = dict(params)
    out["wh"] = wh
    out["bh"] = bh
    return out


def gaussian_net_forward(x, params, *, tb=4096):
    """x: (B, input_dim) float32. params: dict of transposed weights/biases.

    Returns (mu, sigma), each (B, output_dim) float32.
    """
    if "wh" not in params or "bh" not in params:
        params = pack_params(params)

    w1, b1 = params["w1"], params["b1"]          # (D, H), (1, H)
    wh, bh = params["wh"], params["bh"]          # (H, P), (1, P)

    B, D = x.shape
    H = w1.shape[1]
    P = wh.shape[1]
    O = params["wmu"].shape[1]

    # Batch tiling:
    #  - TB multiple of 8 (sublane), capped by the requested tile size,
    #  - also capped at ~B/2 so the grid has >= 2 "parallel" steps whenever B
    #    allows it (keeps both TensorCores busy on v7x).
    half_b = _round_up(max(1, -(-B // 2)), 8)
    TB = max(8, _round_up(min(int(tb), half_b), 8))
    B_pad = _round_up(B, TB)
    if B_pad != B:
        x = jnp.pad(x, ((0, B_pad - B), (0, 0)))
    grid = (B_pad // TB,)

    kernel = functools.partial(gaussian_net_kernel, out_dim=O)

    cost = pl.CostEstimate(
        flops=2 * B_pad * (D * H + H * P),
        transcendentals=B_pad * (H + 2 * O),
        bytes_accessed=4 * (B_pad * D + D * H + H + H * P + P + 2 * B_pad * O),
    )

    mu, sigma = pl.pallas_call(
        kernel,
        out_shape=(
            jax.ShapeDtypeStruct((B_pad, O), jnp.float32),
            jax.ShapeDtypeStruct((B_pad, O), jnp.float32),
        ),
        grid=grid,
        in_specs=[
            pl.BlockSpec((TB, D), lambda i: (i, 0)),   # x: blocked over batch
            pl.BlockSpec((D, H), lambda i: (0, 0)),    # w1: VMEM-resident
            pl.BlockSpec((1, H), lambda i: (0, 0)),    # b1: VMEM-resident
            pl.BlockSpec((H, P), lambda i: (0, 0)),    # packed heads: resident
            pl.BlockSpec((1, P), lambda i: (0, 0)),    # packed biases: resident
        ],
        out_specs=(
            pl.BlockSpec((TB, O), lambda i: (i, 0)),   # mu: narrow writeback
            pl.BlockSpec((TB, O), lambda i: (i, 0)),   # sigma: narrow writeback
        ),
        compiler_params=pltpu.CompilerParams(
            dimension_semantics=("parallel",),
        ),
        cost_estimate=cost,
    )(x, w1, b1, wh, bh)

    if B_pad != B:
        mu = mu[:B]
        sigma = sigma[:B]
    return mu, sigma


def init_params(key, input_dim, output_dim, hidden_dim):
    """Deterministic init matching nn.Linear shapes (weights stored transposed).

    Head weights are pre-packed once here (pack_params) so the forward path
    never rebuilds them.
    """
    ks = jax.random.split(key, 6)

    # nn.Linear default init: U(-1/sqrt(fan_in), 1/sqrt(fan_in))
    def lin(kw, kb, fan_in, fan_out):
        bound = 1.0 / jnp.sqrt(fan_in)
        w = jax.random.uniform(kw, (fan_in, fan_out), jnp.float32, -bound, bound)
        b = jax.random.uniform(kb, (1, fan_out), jnp.float32, -bound, bound)
        return w, b

    w1, b1 = lin(ks[0], ks[1], input_dim, hidden_dim)
    wmu, bmu = lin(ks[2], ks[3], hidden_dim, output_dim)
    wsig, bsig = lin(ks[4], ks[5], hidden_dim, output_dim)
    params = {"w1": w1, "b1": b1, "wmu": wmu, "bmu": bmu,
              "wsig": wsig, "bsig": bsig}
    return pack_params(params)


def reference_forward(x, p):
    h = jnp.tanh(x @ p["w1"] + p["b1"])
    mu = jnp.tanh(h @ p["wmu"] + p["bmu"])
    sigma = jnp.exp(jnp.clip(h @ p["wsig"] + p["bsig"], MIN_SIGMA, MAX_SIGMA))
    return mu, sigma


if __name__ == "__main__":
    key = jax.random.PRNGKey(0)
    k_in, k_in2, k_params = jax.random.split(key, 3)

    batch, input_dim, hidden_dim, output_dim = 8, 32, 128, 8
    params = init_params(k_params, input_dim, output_dim, hidden_dim)

    # Small case (single grid step).
    x = jax.random.normal(k_in, (batch, input_dim), jnp.float32)
    mu, sigma = gaussian_net_forward(x, params)
    jax.block_until_ready((mu, sigma))
    mu_ref, sigma_ref = reference_forward(x, params)
    assert mu.shape == (batch, output_dim) and sigma.shape == (batch, output_dim)
    assert jnp.allclose(mu, mu_ref, atol=1e-5, rtol=1e-5)
    assert jnp.allclose(sigma, sigma_ref, atol=1e-5, rtol=1e-5)

    # Larger, non-multiple batch: exercises batch tiling + padding + multi-step grid.
    batch2 = 300
    x2 = jax.random.normal(k_in2, (batch2, input_dim), jnp.float32)
    mu2, sigma2 = gaussian_net_forward(x2, params, tb=128)
    jax.block_until_ready((mu2, sigma2))
    mu2_ref, sigma2_ref = reference_forward(x2, params)
    assert mu2.shape == (batch2, output_dim) and sigma2.shape == (batch2, output_dim)
    assert jnp.allclose(mu2, mu2_ref, atol=1e-5, rtol=1e-5)
    assert jnp.allclose(sigma2, sigma2_ref, atol=1e-5, rtol=1e-5)

    # Default (large) tile path with a batch big enough for >= 2 grid steps.
    batch3 = 2048
    x3 = jax.random.normal(k_in, (batch3, input_dim), jnp.float32)
    mu3, sigma3 = gaussian_net_forward(x3, params)
    jax.block_until_ready((mu3, sigma3))
    mu3_ref, sigma3_ref = reference_forward(x3, params)
    assert jnp.allclose(mu3, mu3_ref, atol=1e-5, rtol=1e-5)
    assert jnp.allclose(sigma3, sigma3_ref, atol=1e-5, rtol=1e-5)

    print("KERNEL_OK")
</pallas_src>

<mosaic_0001>
module attributes {stable_mosaic.version = 11 : i64} {
  func.func @gaussian_net_kernel(%arg0: i32, %arg1: memref<8x32xf32, #tpu.memory_space<vmem>>, %arg2: memref<32x128xf32, #tpu.memory_space<vmem>>, %arg3: memref<1x128xf32, #tpu.memory_space<vmem>>, %arg4: memref<128x128xf32, #tpu.memory_space<vmem>>, %arg5: memref<1x128xf32, #tpu.memory_space<vmem>>, %arg6: memref<8x8xf32, #tpu.memory_space<vmem>>, %arg7: memref<8x8xf32, #tpu.memory_space<vmem>>) attributes {dimension_semantics = [#tpu.dimension_semantics<parallel>], iteration_bounds = array<i64: 1>, scalar_prefetch = 0 : i64, scratch_operands = 0 : i64, tpu.core_type = #tpu.core_type<tc>, window_params = [{transform_indices = @transform_0, window_bounds = array<i64: 8, 32>}, {pipeline_mode = #tpu.pipeline_mode<synchronous>, transform_indices = @transform_1, window_bounds = array<i64: 32, 128>}, {pipeline_mode = #tpu.pipeline_mode<synchronous>, transform_indices = @transform_2, window_bounds = array<i64: 1, 128>}, {pipeline_mode = #tpu.pipeline_mode<synchronous>, transform_indices = @transform_3, window_bounds = array<i64: 128, 128>}, {pipeline_mode = #tpu.pipeline_mode<synchronous>, transform_indices = @transform_4, window_bounds = array<i64: 1, 128>}, {transform_indices = @transform_5, window_bounds = array<i64: 8, 8>}, {transform_indices = @transform_6, window_bounds = array<i64: 8, 8>}]} {
    %c0 = arith.constant 0 : index
    %c0_0 = arith.constant 0 : index
    %0 = vector.load %arg1[%c0, %c0_0] : memref<8x32xf32, #tpu.memory_space<vmem>>, vector<8x32xf32>
    %c0_1 = arith.constant 0 : index
    %c0_2 = arith.constant 0 : index
    %1 = vector.load %arg2[%c0_1, %c0_2] : memref<32x128xf32, #tpu.memory_space<vmem>>, vector<32x128xf32>
    %cst = arith.constant dense<0.000000e+00> : vector<8x128xf32>
    %2 = tpu.matmul %0, %1, %cst {dimension_numbers = #tpu.dot_dimension_numbers<[1], [0], [0], [1], [0, 0, 1, 1], [], []>} : vector<8x32xf32>, vector<32x128xf32>, vector<8x128xf32> -> vector<8x128xf32>
    %c0_3 = arith.constant 0 : index
    %c0_4 = arith.constant 0 : index
    %3 = vector.load %arg3[%c0_3, %c0_4] : memref<1x128xf32, #tpu.memory_space<vmem>>, vector<1x128xf32>
    %4 = vector.broadcast %3 : vector<1x128xf32> to vector<8x128xf32>
    %5 = arith.addf %2, %4 : vector<8x128xf32>
    %6 = math.tanh %5 : vector<8x128xf32>
    %c0_5 = arith.constant 0 : index
    %c0_6 = arith.constant 0 : index
    %7 = vector.load %arg4[%c0_5, %c0_6] : memref<128x128xf32, #tpu.memory_space<vmem>>, vector<128x128xf32>
    %cst_7 = arith.constant dense<0.000000e+00> : vector<8x128xf32>
    %8 = tpu.matmul %6, %7, %cst_7 {dimension_numbers = #tpu.dot_dimension_numbers<[1], [0], [0], [1], [0, 0, 1, 1], [], []>} : vector<8x128xf32>, vector<128x128xf32>, vector<8x128xf32> -> vector<8x128xf32>
    %c0_8 = arith.constant 0 : index
    %c0_9 = arith.constant 0 : index
    %9 = vector.load %arg5[%c0_8, %c0_9] : memref<1x128xf32, #tpu.memory_space<vmem>>, vector<1x128xf32>
    %10 = vector.broadcast %9 : vector<1x128xf32> to vector<8x128xf32>
    %11 = arith.addf %8, %10 : vector<8x128xf32>
    %12 = vector.extract_strided_slice %11 {offsets = [0, 0], sizes = [8, 8], strides = [1, 1]} : vector<8x128xf32> to vector<8x8xf32>
    %13 = math.tanh %12 : vector<8x8xf32>
    %c0_10 = arith.constant 0 : index
    %c0_11 = arith.constant 0 : index
    %14 = vector.load %arg6[%c0_10, %c0_11] : memref<8x8xf32, #tpu.memory_space<vmem>>, vector<8x8xf32>
    tpu.vector_store %arg6[%c0_10, %c0_11], %13 {strides = array<i32>} : memref<8x8xf32, #tpu.memory_space<vmem>>, vector<8x8xf32>,
    %15 = vector.extract_strided_slice %11 {offsets = [0, 8], sizes = [8, 8], strides = [1, 1]} : vector<8x128xf32> to vector<8x8xf32>
    %cst_12 = arith.constant -2.000000e+01 : f32
    %cst_13 = arith.constant 2.000000e+00 : f32
    %16 = vector.broadcast %cst_12 : f32 to vector<8x8xf32>
    %17 = arith.maximumf %16, %15 : vector<8x8xf32>
    %18 = vector.broadcast %cst_13 : f32 to vector<8x8xf32>
    %19 = arith.minimumf %18, %17 : vector<8x8xf32>
    %20 = math.exp %19 : vector<8x8xf32>
    %c0_14 = arith.constant 0 : index
    %c0_15 = arith.constant 0 : index
    %21 = vector.load %arg7[%c0_14, %c0_15] : memref<8x8xf32, #tpu.memory_space<vmem>>, vector<8x8xf32>
    tpu.vector_store %arg7[%c0_14, %c0_15], %20 {strides = array<i32>} : memref<8x8xf32, #tpu.memory_space<vmem>>, vector<8x8xf32>,
    return
  }
  func.func @transform_0(%arg0: i32) -> (i32, i32) {
    %c0_i32 = arith.constant 0 : i32
    %c0_i32_0 = arith.constant 0 : i32
    return %arg0, %c0_i32 : i32, i32
  }
  func.func @transform_1(%arg0: i32) -> (i32, i32) {
    %c0_i32 = arith.constant 0 : i32
    %c0_i32_0 = arith.constant 0 : i32
    %c0_i32_1 = arith.constant 0 : i32
    return %c0_i32, %c0_i32_0 : i32, i32
  }
  func.func @transform_2(%arg0: i32) -> (i32, i32) {
    %c0_i32 = arith.constant 0 : i32
    %c0_i32_0 = arith.constant 0 : i32
    %c0_i32_1 = arith.constant 0 : i32
    return %c0_i32, %c0_i32_0 : i32, i32
  }
  func.func @transform_3(%arg0: i32) -> (i32, i32) {
    %c0_i32 = arith.constant 0 : i32
    %c0_i32_0 = arith.constant 0 : i32
    %c0_i32_1 = arith.constant 0 : i32
    return %c0_i32, %c0_i32_0 : i32, i32
  }
  func.func @transform_4(%arg0: i32) -> (i32, i32) {
    %c0_i32 = arith.constant 0 : i32
    %c0_i32_0 = arith.constant 0 : i32
    %c0_i32_1 = arith.constant 0 : i32
    return %c0_i32, %c0_i32_0 : i32, i32
  }
  func.func @transform_5(%arg0: i32) -> (i32, i32) {
    %c0_i32 = arith.constant 0 : i32
    %c0_i32_0 = arith.constant 0 : i32
    return %arg0, %c0_i32 : i32, i32
  }
  func.func @transform_6(%arg0: i32) -> (i32, i32) {
    %c0_i32 = arith.constant 0 : i32
    %c0_i32_0 = arith.constant 0 : i32
    return %arg0, %c0_i32 : i32, i32
  }
}

</mosaic_0001>

<llo_original>
// kernel: tpu_custom_call.1
$region0: #{tpu_custom_call.1}
  #allocation0 [shape = 'u32[]', space=smem, size = 0x4, offset = 0x4, fixed_abs, tag = 'smem constant byte address 0x4 - core index']
  #allocation1 [shape = 'u32[72,128]{1,0:T(1,128)}', space=vmem, size = 0x9000, scoped, tag = 'internal scratch']
  %s0 = inlined_call_operand.hbm [shape: f32[8,32], index: 0, kind: input, shape index: {}]
  %s1 = inlined_call_operand.hbm [shape: f32[32,128], index: 1, kind: input, shape index: {}]
  %s2 = inlined_call_operand.vmem [shape: f32[1,128], index: 2, kind: input, shape index: {}]
  %s3 = inlined_call_operand.hbm [shape: f32[128,128], index: 3, kind: input, shape index: {}]
  %s4 = inlined_call_operand.vmem [shape: f32[1,128], index: 4, kind: input, shape index: {}]
  %s5 = inlined_call_operand.hbm [shape: f32[8,8], index: 5, kind: output, shape index: {0}]
  %s6 = inlined_call_operand.hbm [shape: f32[8,8], index: 6, kind: output, shape index: {1}]
  %7 = xla_tuple %s5, %s6
  %s8 = sld [smem:[#allocation0]]
  $region50: #{tpu_custom_call.1} parent=0
    _
  %s10 = ssub.s32 1, %s8
  %s11 = scalar_select 0, %s10, %s8
  $region1: #{tpu_custom_call.1} parent=0
    #allocation2 [shape = 'u8[4096]{0}', space=vmem, size = 0x1000, scoped, tag = 'input window, operand 0, single buffered']
    #allocation3 [shape = 's32[1]{0}', space=sflag, size = 0x4, scoped, tag = 'scoped memory for tpu_custom_call.1']
    #allocation4 [shape = 's32[1]{0}', space=sflag, size = 0x4, scoped, tag = 'scoped memory for tpu_custom_call.1']
    #allocation5 [shape = 'u8[16384]{0}', space=vmem, size = 0x4000, scoped, tag = 'input window, operand 1, single buffered']
    #allocation6 [shape = 's32[1]{0}', space=sflag, size = 0x4, scoped, tag = 'scoped memory for tpu_custom_call.1']
    #allocation7 [shape = 'u8[65536]{0}', space=vmem, size = 0x10000, scoped, tag = 'input window, operand 3, single buffered']
    #allocation8 [shape = 'u8[4096]{0}', space=vmem, size = 0x1000, scoped, tag = 'output window, operand 0, single buffered']
    #allocation9 [shape = 'u8[4096]{0}', space=vmem, size = 0x1000, scoped, tag = 'output window, operand 1, single buffered']
    #allocation10 [shape = 's32[1]{0}', space=sflag, size = 0x4, scoped, tag = 'scoped memory for tpu_custom_call.1']
    %12 = vsyncpa [#allocation3], 0
    %13 = vsyncpa [#allocation6], 0
    %14 = vsyncpa [#allocation4], 0
    %15 = vsyncpa [#allocation10], 0
    // Predicated region
    $region2: #{tpu_custom_call.1} parent=1 // pred_check
      _
    $region3: #{tpu_custom_call.1} parent=1 // pred_check_branch
      %17 = sbr.rel (0) target = $region5
    $region4: #{tpu_custom_call.1} parent=1 // pred_region
      %19 = vsyncadd [#allocation3], 0
      %s21 = sshll.u32 %s0, 4
      %s22 = int_to_ptr.hbm [resolvable:$true] %s21
      %s23 = sshll.u32 [#allocation2], 4
      %s24 = int_to_ptr.vmem [resolvable:$true] %s23
      %26 = dma.hbm_to_vmem [thread:$0]  %s22, 128, %s24, [#allocation3]
    $region5: #{tpu_custom_call.1} parent=1 // pred_fallthru
      _
    // Predicated region
    $region6: #{tpu_custom_call.1} parent=1 // pred_check
      _
    $region7: #{tpu_custom_call.1} parent=1 // pred_check_branch
      %28 = sbr.rel (0) target = $region9
    $region8: #{tpu_custom_call.1} parent=1 // pred_region
      %30 = vsyncadd [#allocation6], 0
      %s31 = sshll.u32 %s1, 4
      %s32 = int_to_ptr.hbm [resolvable:$true] %s31
      %s33 = sshll.u32 [#allocation5], 4
      %s34 = int_to_ptr.vmem [resolvable:$true] %s33
      %39 = dma.hbm_to_vmem [thread:$0]  %s32, 512, %s34, [#allocation6], 128, 128, 8
    $region9: #{tpu_custom_call.1} parent=1 // pred_fallthru
      _
    // Predicated region
    $region10: #{tpu_custom_call.1} parent=1 // pred_check
      _
    $region11: #{tpu_custom_call.1} parent=1 // pred_check_branch
      %41 = sbr.rel (0) target = $region13
    $region12: #{tpu_custom_call.1} parent=1 // pred_region
      _
    $region13: #{tpu_custom_call.1} parent=1 // pred_fallthru
      _
    // Predicated region
    $region14: #{tpu_custom_call.1} parent=1 // pred_check
      _
    $region15: #{tpu_custom_call.1} parent=1 // pred_check_branch
      %43 = sbr.rel (0) target = $region17
    $region16: #{tpu_custom_call.1} parent=1 // pred_region
      %45 = vsyncadd [#allocation6], 0
      %s46 = sshll.u32 %s3, 4
      %s47 = int_to_ptr.hbm [resolvable:$true] %s46
      %s48 = sshll.u32 [#allocation7], 4
      %s49 = int_to_ptr.vmem [resolvable:$true] %s48
      %54 = dma.hbm_to_vmem [thread:$0]  %s47, 2048, %s49, [#allocation6], 128, 128, 8
    $region17: #{tpu_custom_call.1} parent=1 // pred_fallthru
      _
    // Predicated region
    $region18: #{tpu_custom_call.1} parent=1 // pred_check
      _
    $region19: #{tpu_custom_call.1} parent=1 // pred_check_branch
      %56 = sbr.rel (0) target = $region21
    $region20: #{tpu_custom_call.1} parent=1 // pred_region
      _
    $region21: #{tpu_custom_call.1} parent=1 // pred_fallthru
      _
    // Predicated region
    $region22: #{tpu_custom_call.1} parent=1 // pred_check
      _
    $region23: #{tpu_custom_call.1} parent=1 // pred_check_branch
      %58 = sbr.rel (0) target = $region25
    $region24: #{tpu_custom_call.1} parent=1 // pred_region
      %60 = dma.done [#allocation3], 128
    $region25: #{tpu_custom_call.1} parent=1 // pred_fallthru
      _
    // Predicated region
    $region26: #{tpu_custom_call.1} parent=1 // pred_check
      _
    $region27: #{tpu_custom_call.1} parent=1 // pred_check_branch
      %62 = sbr.rel (0) target = $region29
    $region28: #{tpu_custom_call.1} parent=1 // pred_region
      %64 = dma.done [#allocation6], 512
    $region29: #{tpu_custom_call.1} parent=1 // pred_fallthru
      _
    // Predicated region
    $region30: #{tpu_custom_call.1} parent=1 // pred_check
      _
    $region31: #{tpu_custom_call.1} parent=1 // pred_check_branch
      %66 = sbr.rel (0) target = $region33
    $region32: #{tpu_custom_call.1} parent=1 // pred_region
      %68 = dma.done [#allocation6], 2048
    $region33: #{tpu_custom_call.1} parent=1 // pred_fallthru
      _
    %v69 = vld [vmem:[#allocation2] sm:$0xff]
    %v70 = vld [vmem:[#allocation5] sm:$0xff]
    %v71 = vld [vmem:[#allocation5 + $0x8] sm:$0xff]
    %v72 = vld [vmem:[#allocation5 + $0x10] sm:$0xff]
    %v73 = vld [vmem:[#allocation5 + $0x18] sm:$0xff]
    %v74 = vld [vmem:[%s2] sm:$0x1]
    %v76 = vperm.slane %v74, 0
    %vm78 = vcmask 261120
    %v80 = vsel %vm78, %v69, 0
    %82 = vmatpush.msra.mxu0 0.0
    %83 = vmatpush.msra.mxu0 0.0
    %84 = vmatpush.msra.mxu0 0.0
    %85 = vmatpush.msra.mxu0 0.0
    %86 = vmatpush.msra.mxu0 0.0
    %87 = vmatpush.msra.mxu0 0.0
    %88 = vmatpush.msra.mxu0 0.0
    %89 = vmatpush.msra.mxu0 0.0
    %90 = vmatpush.msra.mxu0 0.0
    %91 = vmatpush.msra.mxu0 0.0
    %92 = vmatpush.msra.mxu0 0.0
    %93 = vmatpush.msra.mxu0 0.0
    %94 = vmatpush.msra.mxu0 %v73
    %95 = vmatpush.msra.mxu0 %v72
    %96 = vmatpush.msra.mxu0 %v71
    %97 = vmatpush.msra.mxu0 %v70
    %98 = vmatmul.f32.gmra.mxu0 %v80
    %v99 = vpop.f32.mrf.mxu0
    %v100 = vadd.f32 %v76, %v99
    %101 = vdwg.mxu0
    %v102 = vtanh.pop %v100
    %v103 = vld [vmem:[#allocation7] sm:$0xff]
    %v104 = vld [vmem:[#allocation7 + $0x8] sm:$0xff]
    %v105 = vld [vmem:[#allocation7 + $0x10] sm:$0xff]
    %v106 = vld [vmem:[#allocation7 + $0x18] sm:$0xff]
    %v107 = vld [vmem:[#allocation7 + $0x20] sm:$0xff]
    %v108 = vld [vmem:[#allocation7 + $0x28] sm:$0xff]
    %v109 = vld [vmem:[#allocation7 + $0x30] sm:$0xff]
    %v110 = vld [vmem:[#allocation7 + $0x38] sm:$0xff]
    %v111 = vld [vmem:[#allocation7 + $0x40] sm:$0xff]
    %v112 = vld [vmem:[#allocation7 + $0x48] sm:$0xff]
    %v113 = vld [vmem:[#allocation7 + $0x50] sm:$0xff]
    %v114 = vld [vmem:[#allocation7 + $0x58] sm:$0xff]
    %v115 = vld [vmem:[#allocation7 + $0x60] sm:$0xff]
    %v116 = vld [vmem:[#allocation7 + $0x68] sm:$0xff]
    %v117 = vld [vmem:[#allocation7 + $0x70] sm:$0xff]
    %v118 = vld [vmem:[#allocation7 + $0x78] sm:$0xff]
    %v119 = vld [vmem:[%s4] sm:$0x1]
    %v121 = vperm.slane %v119, 0
    %123 = vmatpush.msra.mxu0 %v118
    %124 = vmatpush.msra.mxu0 %v117
    %125 = vmatpush.msra.mxu0 %v116
    %126 = vmatpush.msra.mxu0 %v115
    %127 = vmatpush.msra.mxu0 %v114
    %128 = vmatpush.msra.mxu0 %v113
    %129 = vmatpush.msra.mxu0 %v112
    %130 = vmatpush.msra.mxu0 %v111
    %131 = vmatpush.msra.mxu0 %v110
    %132 = vmatpush.msra.mxu0 %v109
    %133 = vmatpush.msra.mxu0 %v108
    %134 = vmatpush.msra.mxu0 %v107
    %135 = vmatpush.msra.mxu0 %v106
    %136 = vmatpush.msra.mxu0 %v105
    %137 = vmatpush.msra.mxu0 %v104
    %138 = vmatpush.msra.mxu0 %v103
    %139 = vmatmul.f32.gmra.mxu0 %v102
    %v140 = vpop.f32.mrf.mxu0
    %v141 = vadd.f32 %v121, %v140
    %142 = vdwg.mxu0
    %v143 = vtanh.pop %v141
    %vm144 = vcmask 64512
    %145 = vst.msk [vmem:[#allocation8] sm:$0xff] %vm144, %v143
    %v146 = vmax.f32 %v141, -20.0
    %v147 = vmin.f32 %v146, 2.0
    %v148 = vmul.f32 %v147, 1.442695
    %v149 = vpow.pop %v148
    %151 = vrot.lane.b32.xlu0 %v149, 120
    %v152 = vpop.permute.xlu0 %151
    %154 = vst.msk [vmem:[#allocation9] sm:$0xff] %vm144, %v152
    // Predicated region
    $region34: #{tpu_custom_call.1} parent=1 // pred_check
      _
    $region35: #{tpu_custom_call.1} parent=1 // pred_check_branch
      %156 = sbr.rel (0) target = $region37
    $region36: #{tpu_custom_call.1} parent=1 // pred_region
      %158 = vsyncadd [#allocation4], 0
      %s160 = sshll.u32 [#allocation8], 4
      %s161 = int_to_ptr.vmem [resolvable:$true] %s160
      %s162 = sshll.u32 %s5, 4
      %s163 = int_to_ptr.hbm [resolvable:$true] %s162
      %165 = dma.vmem_to_hbm [thread:$0]  %s161, 128, %s163, [#allocation4]
    $region37: #{tpu_custom_call.1} parent=1 // pred_fallthru
      _
    // Predicated region
    $region38: #{tpu_custom_call.1} parent=1 // pred_check
      _
    $region39: #{tpu_custom_call.1} parent=1 // pred_check_branch
      %167 = sbr.rel (0) target = $region41
    $region40: #{tpu_custom_call.1} parent=1 // pred_region
      %169 = vsyncadd [#allocation10], 0
      %s171 = sshll.u32 [#allocation9], 4
      %s172 = int_to_ptr.vmem [resolvable:$true] %s171
      %s173 = sshll.u32 %s6, 4
      %s174 = int_to_ptr.hbm [resolvable:$true] %s173
      %176 = dma.vmem_to_hbm [thread:$0]  %s172, 128, %s174, [#allocation10]
    $region41: #{tpu_custom_call.1} parent=1 // pred_fallthru
      _
    // Predicated region
    $region42: #{tpu_custom_call.1} parent=1 // pred_check
      _
    $region43: #{tpu_custom_call.1} parent=1 // pred_check_branch
      %178 = sbr.rel (0) target = $region45
    $region44: #{tpu_custom_call.1} parent=1 // pred_region
      %180 = dma.done [#allocation4], 128
    $region45: #{tpu_custom_call.1} parent=1 // pred_fallthru
      _
    // Predicated region
    $region46: #{tpu_custom_call.1} parent=1 // pred_check
      _
    $region47: #{tpu_custom_call.1} parent=1 // pred_check_branch
      %182 = sbr.rel (0) target = $region49
    $region48: #{tpu_custom_call.1} parent=1 // pred_region
      %184 = dma.done [#allocation10], 128
    $region49: #{tpu_custom_call.1} parent=1 // pred_fallthru
      _
    %185 = vsyncpa [#allocation3], 1
    %186 = vsyncpa [#allocation6], 1
    %187 = vsyncpa [#allocation4], 1
    %188 = vsyncpa [#allocation10], 1

</llo_original>
